<compile_context>
chip_gen: v5e
topology: v5e:2x2
jax: 0.10.0
libtpu: 0.0.40
codegen_flags: <defaults>
</compile_context>

<pallas_src>
import math
import jax
import jax.numpy as jnp
from jax.experimental import pallas as pl
from jax.experimental.pallas import tpu as pltpu  # noqa: F401  (TPU backend)

LANE = 128     # vreg lane width -> lane-dense output slabs
SUBLANE = 8    # sublane multiple for clean row tiling


# ----------------------------------------------------------------------------
# Pallas kernels
# ----------------------------------------------------------------------------
def _linear_kernel(x_ref, w_ref, b_ref, o_ref):
    # y = x @ W + b   (W stored as [in, out], i.e. torch W^T; out lane-padded)
    o_ref[...] = (
        jnp.dot(x_ref[...], w_ref[...], preferred_element_type=jnp.float32)
        + b_ref[...]
    )


def _fused_heads_kernel(x_ref, w1_ref, b1_ref, w2_ref, b2_ref, w3_ref, b3_ref, o_ref):
    # Fused multi-head 3-layer MLP (matches MLP.forward for every packed head):
    #   relu(x@W1+b1) -> relu(.@W2+b2) -> .@W3+b3
    # W1 column-concat, W2 block-diagonal, W3 block-placed; all lane-padded to
    # 128 so every intermediate vreg and the final store are fully lane-dense.
    h = jnp.dot(x_ref[...], w1_ref[...], preferred_element_type=jnp.float32) + b1_ref[...]
    h = jnp.maximum(h, 0.0)
    h = jnp.dot(h, w2_ref[...], preferred_element_type=jnp.float32) + b2_ref[...]
    h = jnp.maximum(h, 0.0)
    o_ref[...] = jnp.dot(h, w3_ref[...], preferred_element_type=jnp.float32) + b3_ref[...]


# ----------------------------------------------------------------------------
# Layout helpers (pure plumbing, run at setup or as cheap XLA ops)
# ----------------------------------------------------------------------------
def _pad_lanes(a, target=LANE):
    """Zero-pad the last (lane) axis of `a` up to `target` columns."""
    pad = target - a.shape[-1]
    if pad <= 0:
        return a
    widths = [(0, 0)] * (a.ndim - 1) + [(0, pad)]
    return jnp.pad(a, widths)


def _pad_rows(a, mult=SUBLANE):
    """Zero-pad rows of a 2-D array up to a multiple of `mult`."""
    pad = (-a.shape[0]) % mult
    if pad:
        a = jnp.pad(a, ((0, pad), (0, 0)))
    return a


def pack_head_params(head_params):
    """Pack K independent 3-layer MLP heads (Dout=1 each) into one lane-dense
    weight set so a single 3-matmul chain evaluates all heads at once.

    Runs ONCE at setup (eager), never inside the jitted forward.
    """
    nh = len(head_params)
    D = head_params[0][0].shape[0]
    H = head_params[0][0].shape[1]
    assert nh * H <= LANE, "packed hidden width must fit in one lane group"

    w1p = jnp.zeros((D, LANE), jnp.float32)
    b1p = jnp.zeros((1, LANE), jnp.float32)
    w2p = jnp.zeros((LANE, LANE), jnp.float32)
    b2p = jnp.zeros((1, LANE), jnp.float32)
    w3p = jnp.zeros((LANE, LANE), jnp.float32)
    b3p = jnp.zeros((1, LANE), jnp.float32)
    for i, (w1, b1, w2, b2, w3, b3) in enumerate(head_params):
        s = slice(i * H, (i + 1) * H)
        w1p = w1p.at[:, s].set(w1)
        b1p = b1p.at[0, s].set(b1)
        w2p = w2p.at[s, s].set(w2)
        b2p = b2p.at[0, s].set(b2)
        w3p = w3p.at[s, i:i + 1].set(w3)
        b3p = b3p.at[0, i].set(b3[0])
    return (w1p, b1p, w2p, b2p, w3p, b3p)


# ----------------------------------------------------------------------------
# Pallas wrappers
# ----------------------------------------------------------------------------
def pallas_linear(x, w_p, b_p, dout):
    """x: [N, Din] @ pre-padded w_p: [Din, 128] + b_p: [1, 128] -> [N, dout]."""
    n = x.shape[0]
    xp = _pad_rows(x)
    N, Din = xp.shape
    out = pl.pallas_call(
        _linear_kernel,
        out_shape=jax.ShapeDtypeStruct((N, LANE), jnp.float32),
        in_specs=[
            pl.BlockSpec((N, Din), lambda: (0, 0)),
            pl.BlockSpec((Din, LANE), lambda: (0, 0)),
            pl.BlockSpec((1, LANE), lambda: (0, 0)),
        ],
        out_specs=pl.BlockSpec((N, LANE), lambda: (0, 0)),
    )(xp, w_p, b_p)
    return out[:n, :dout]


def pallas_fused_mlp_heads(x, packed, nh):
    """Run `nh` independent 3-layer MLP heads as ONE kernel.

    x      : [N, D]
    packed : (w1p, b1p, w2p, b2p, w3p, b3p) from pack_head_params
    returns: [N, nh]  (column i = head i's score)
    """
    w1p, b1p, w2p, b2p, w3p, b3p = packed
    n = x.shape[0]
    xp = _pad_rows(x)
    N, D = xp.shape
    H1 = w1p.shape[1]  # == LANE
    out = pl.pallas_call(
        _fused_heads_kernel,
        out_shape=jax.ShapeDtypeStruct((N, LANE), jnp.float32),
        in_specs=[
            pl.BlockSpec((N, D), lambda: (0, 0)),
            pl.BlockSpec((D, H1), lambda: (0, 0)),
            pl.BlockSpec((1, H1), lambda: (0, 0)),
            pl.BlockSpec((H1, H1), lambda: (0, 0)),
            pl.BlockSpec((1, H1), lambda: (0, 0)),
            pl.BlockSpec((H1, LANE), lambda: (0, 0)),
            pl.BlockSpec((1, LANE), lambda: (0, 0)),
        ],
        out_specs=pl.BlockSpec((N, LANE), lambda: (0, 0)),
    )(xp, w1p, b1p, w2p, b2p, w3p, b3p)
    return out[:n, :nh]


# ----------------------------------------------------------------------------
# Model configuration (small shapes)
# ----------------------------------------------------------------------------
HIDDEN_DIM = 32          # args.hidden_dim
BERT_CHANNELS = 64       # self.bert.num_channels
MAX_QUERY_LEN = 8        # args.max_query_len
IMG_H = IMG_W = 4        # spatial size of backbone level-2 feature map
N_IMG_TOK = IMG_H * IMG_W    # analogue of the ":400" image-token slice
NUM_DEC_LAYERS = 2       # return_intermediate_dec=True -> stacked decoder outputs
BATCH = 2
TASK = "box_seg"         # both heads active


def init_params(key):
    """Deterministic parameter init matching the nn.Linear / MLP shapes, plus
    the one-time lane-dense packing consumed by the Pallas kernels."""
    ks = jax.random.split(key, 16)

    def lin(k, din, dout):
        kw, kb = jax.random.split(k)
        lim = 1.0 / math.sqrt(din)
        w = jax.random.uniform(kw, (din, dout), jnp.float32, -lim, lim)
        b = jax.random.uniform(kb, (dout,), jnp.float32, -lim, lim)
        return w, b

    p = {}
    # self.txt_proj = nn.Linear(bert.num_channels, hidden_dim)
    p["txt_proj_w"], p["txt_proj_b"] = lin(ks[0], BERT_CHANNELS, HIDDEN_DIM)
    # self.box_mlp = MLP(hidden, hidden, 1, 3)
    p["box_w1"], p["box_b1"] = lin(ks[1], HIDDEN_DIM, HIDDEN_DIM)
    p["box_w2"], p["box_b2"] = lin(ks[2], HIDDEN_DIM, HIDDEN_DIM)
    p["box_w3"], p["box_b3"] = lin(ks[3], HIDDEN_DIM, 1)
    # self.seg_mlp = MLP(hidden, hidden, 1, 3)
    p["seg_w1"], p["seg_b1"] = lin(ks[4], HIDDEN_DIM, HIDDEN_DIM)
    p["seg_w2"], p["seg_b2"] = lin(ks[5], HIDDEN_DIM, HIDDEN_DIM)
    p["seg_w3"], p["seg_b3"] = lin(ks[6], HIDDEN_DIM, 1)

    # One-time layout plumbing for the kernels (lane-dense weight slabs).
    p["txt_proj_w_p"] = _pad_lanes(p["txt_proj_w"])                     # [64, 128]
    p["txt_proj_b_p"] = _pad_lanes(p["txt_proj_b"].reshape(1, -1))      # [1, 128]

    heads = []
    if "box" in TASK:
        heads.append((p["box_w1"], p["box_b1"], p["box_w2"], p["box_b2"],
                      p["box_w3"], p["box_b3"]))
    if "seg" in TASK:
        heads.append((p["seg_w1"], p["seg_b1"], p["seg_w2"], p["seg_b2"],
                      p["seg_w3"], p["seg_b3"]))
    p["heads_packed"] = pack_head_params(heads) if heads else None
    return p


def sine_position_embedding(seq_len, dim):
    """Deterministic 1-D sine position encoding for the text tokens."""
    # TODO(synk): build_position_encoding is an external factory; stand-in sine PE.
    pos = jnp.arange(seq_len, dtype=jnp.float32)[:, None]
    i = jnp.arange(dim, dtype=jnp.float32)[None, :]
    angle = pos / jnp.power(10000.0, (2.0 * jnp.floor(i / 2.0)) / dim)
    pe = jnp.where((jnp.arange(dim) % 2) == 0, jnp.sin(angle), jnp.cos(angle))
    return pe  # [seq_len, dim]


def model_forward(params, img_src_nchw, img_mask_hw, img_pos_nchw, txt_feat, txt_mask):
    """
    img_src_nchw : [bs, hidden, H, W]   backbone level-2 feature (NCHW)
    img_mask_hw  : [bs, H, W]           bool padding mask
    img_pos_nchw : [bs, hidden, H, W]   image positional encoding (NCHW)
    txt_feat     : [bs, L, bert_ch]     bert features
    txt_mask     : [bs, L]              bool padding mask
    """
    bs = img_src_nchw.shape[0]

    # img_srcs[2].tensors.flatten(-2) ; mask.flatten(-2) ; pos.flatten(-2).transpose(1,2)
    img_src = img_src_nchw.reshape(bs, HIDDEN_DIM, N_IMG_TOK)          # [bs, C, HW]
    img_mask = img_mask_hw.reshape(bs, N_IMG_TOK)                      # [bs, HW]
    img_pos = jnp.transpose(
        img_pos_nchw.reshape(bs, HIDDEN_DIM, N_IMG_TOK), (0, 2, 1)
    )                                                                  # [bs, HW, C]

    # txt_src = self.txt_proj(txt_src)  -- Pallas linear on [bs*L, bert_ch]
    L = txt_feat.shape[1]
    txt_src = pallas_linear(
        txt_feat.reshape(bs * L, BERT_CHANNELS),
        params["txt_proj_w_p"],
        params["txt_proj_b_p"],
        HIDDEN_DIM,
    ).reshape(bs, L, HIDDEN_DIM)

    # txt_pos = self.position_embedding(txt_src)
    txt_pos = jnp.broadcast_to(
        sine_position_embedding(L, HIDDEN_DIM)[None], (bs, L, HIDDEN_DIM)
    )

    # source = cat([img_src.permute(2,0,1), txt_src.transpose(0,1)], dim=0)
    source = jnp.concatenate(
        [jnp.transpose(img_src, (2, 0, 1)), jnp.transpose(txt_src, (1, 0, 2))], axis=0
    )                                                                  # [S, bs, C]
    # pos = cat([img_pos, txt_pos], dim=1)
    pos = jnp.concatenate([img_pos, txt_pos], axis=1)                  # [bs, S, C]
    # mask = cat([img_mask, txt_mask], dim=-1)
    mask = jnp.concatenate([img_mask, txt_mask], axis=-1)              # [bs, S]

    # vt_embs = self.ca(source, pos, mask)
    # TODO(synk): build_ca_layer (cross-attention decoder) is an external factory not
    # defined in the reference source; stand-in: pos-conditioned pass-through stacked
    # over the intermediate-decoder-layer axis (shape [num_layers, bs, S, C]).
    vt = jnp.transpose(source, (1, 0, 2)) + pos                        # [bs, S, C]
    vt = jnp.where(mask[:, :, None], 0.0, vt)
    vt_embs = jnp.broadcast_to(vt[None], (NUM_DEC_LAYERS, bs) + vt.shape[1:])

    # vt_embs[:, :, :400]  -> here the image-token slice is :N_IMG_TOK
    sliced = vt_embs[:, :, :N_IMG_TOK]                                 # [Ld, bs, HW, C]
    flat = sliced.reshape(-1, HIDDEN_DIM)                              # [Ld*bs*HW, C]

    # Fused box/seg heads: one pallas_call, one [N, num_heads] result.
    names = []
    if "box" in TASK:
        names.append("box")
    if "seg" in TASK:
        names.append("seg")

    box_score = seg_score = None
    if names:
        scores = pallas_fused_mlp_heads(flat, params["heads_packed"], len(names))
        for col, name in enumerate(names):
            s = scores[:, col].reshape(NUM_DEC_LAYERS, bs, N_IMG_TOK)  # squeeze(-1)
            if name == "box":
                box_score = s
            else:
                seg_score = s

    return {"box_score": box_score, "seg_score": seg_score, "img_mask": img_mask}


if __name__ == "__main__":
    key = jax.random.PRNGKey(0)
    kp, k1, k2, k3, k4 = jax.random.split(key, 5)

    params = init_params(kp)

    # TODO(synk): backbone / bert are external builders; synthesize their outputs.
    img_src = jax.random.normal(k1, (BATCH, HIDDEN_DIM, IMG_H, IMG_W), jnp.float32)
    img_pos = jax.random.normal(k2, (BATCH, HIDDEN_DIM, IMG_H, IMG_W), jnp.float32)
    img_mask = jnp.zeros((BATCH, IMG_H, IMG_W), dtype=bool)
    txt_feat = jax.random.normal(k3, (BATCH, MAX_QUERY_LEN, BERT_CHANNELS), jnp.float32)
    txt_mask = jax.random.uniform(k4, (BATCH, MAX_QUERY_LEN)) > 0.8

    fwd = jax.jit(model_forward)
    out = fwd(params, img_src, img_mask, img_pos, txt_feat, txt_mask)
    jax.block_until_ready(out)

    assert out["box_score"].shape == (NUM_DEC_LAYERS, BATCH, N_IMG_TOK)
    assert out["seg_score"].shape == (NUM_DEC_LAYERS, BATCH, N_IMG_TOK)
    assert out["img_mask"].shape == (BATCH, N_IMG_TOK)
    print("KERNEL_OK")
</pallas_src>

<mosaic_0001>
module attributes {stable_mosaic.version = 11 : i64} {
  func.func @_fused_heads_kernel(%arg0: memref<64x32xf32, #tpu.memory_space<vmem>>, %arg1: memref<32x128xf32, #tpu.memory_space<vmem>>, %arg2: memref<1x128xf32, #tpu.memory_space<vmem>>, %arg3: memref<128x128xf32, #tpu.memory_space<vmem>>, %arg4: memref<1x128xf32, #tpu.memory_space<vmem>>, %arg5: memref<128x128xf32, #tpu.memory_space<vmem>>, %arg6: memref<1x128xf32, #tpu.memory_space<vmem>>, %arg7: memref<64x128xf32, #tpu.memory_space<vmem>>) attributes {dimension_semantics = [], scalar_prefetch = 0 : i64, scratch_operands = 0 : i64, tpu.core_type = #tpu.core_type<tc>} {
    %c0 = arith.constant 0 : index
    %c0_0 = arith.constant 0 : index
    %0 = vector.load %arg0[%c0, %c0_0] : memref<64x32xf32, #tpu.memory_space<vmem>>, vector<64x32xf32>
    %c0_1 = arith.constant 0 : index
    %c0_2 = arith.constant 0 : index
    %1 = vector.load %arg1[%c0_1, %c0_2] : memref<32x128xf32, #tpu.memory_space<vmem>>, vector<32x128xf32>
    %cst = arith.constant dense<0.000000e+00> : vector<64x128xf32>
    %2 = tpu.matmul %0, %1, %cst {dimension_numbers = #tpu.dot_dimension_numbers<[1], [0], [0], [1], [0, 0, 1, 1], [], []>} : vector<64x32xf32>, vector<32x128xf32>, vector<64x128xf32> -> vector<64x128xf32>
    %c0_3 = arith.constant 0 : index
    %c0_4 = arith.constant 0 : index
    %3 = vector.load %arg2[%c0_3, %c0_4] : memref<1x128xf32, #tpu.memory_space<vmem>>, vector<1x128xf32>
    %4 = vector.broadcast %3 : vector<1x128xf32> to vector<64x128xf32>
    %5 = arith.addf %2, %4 : vector<64x128xf32>
    %cst_5 = arith.constant 0.000000e+00 : f32
    %6 = vector.broadcast %cst_5 : f32 to vector<64x128xf32>
    %7 = arith.maximumf %5, %6 : vector<64x128xf32>
    %c0_6 = arith.constant 0 : index
    %c0_7 = arith.constant 0 : index
    %8 = vector.load %arg3[%c0_6, %c0_7] : memref<128x128xf32, #tpu.memory_space<vmem>>, vector<128x128xf32>
    %cst_8 = arith.constant dense<0.000000e+00> : vector<64x128xf32>
    %9 = tpu.matmul %7, %8, %cst_8 {dimension_numbers = #tpu.dot_dimension_numbers<[1], [0], [0], [1], [0, 0, 1, 1], [], []>} : vector<64x128xf32>, vector<128x128xf32>, vector<64x128xf32> -> vector<64x128xf32>
    %c0_9 = arith.constant 0 : index
    %c0_10 = arith.constant 0 : index
    %10 = vector.load %arg4[%c0_9, %c0_10] : memref<1x128xf32, #tpu.memory_space<vmem>>, vector<1x128xf32>
    %11 = vector.broadcast %10 : vector<1x128xf32> to vector<64x128xf32>
    %12 = arith.addf %9, %11 : vector<64x128xf32>
    %cst_11 = arith.constant 0.000000e+00 : f32
    %13 = vector.broadcast %cst_11 : f32 to vector<64x128xf32>
    %14 = arith.maximumf %12, %13 : vector<64x128xf32>
    %c0_12 = arith.constant 0 : index
    %c0_13 = arith.constant 0 : index
    %15 = vector.load %arg5[%c0_12, %c0_13] : memref<128x128xf32, #tpu.memory_space<vmem>>, vector<128x128xf32>
    %cst_14 = arith.constant dense<0.000000e+00> : vector<64x128xf32>
    %16 = tpu.matmul %14, %15, %cst_14 {dimension_numbers = #tpu.dot_dimension_numbers<[1], [0], [0], [1], [0, 0, 1, 1], [], []>} : vector<64x128xf32>, vector<128x128xf32>, vector<64x128xf32> -> vector<64x128xf32>
    %c0_15 = arith.constant 0 : index
    %c0_16 = arith.constant 0 : index
    %17 = vector.load %arg6[%c0_15, %c0_16] : memref<1x128xf32, #tpu.memory_space<vmem>>, vector<1x128xf32>
    %18 = vector.broadcast %17 : vector<1x128xf32> to vector<64x128xf32>
    %19 = arith.addf %16, %18 : vector<64x128xf32>
    %c0_17 = arith.constant 0 : index
    %c0_18 = arith.constant 0 : index
    %20 = vector.load %arg7[%c0_17, %c0_18] : memref<64x128xf32, #tpu.memory_space<vmem>>, vector<64x128xf32>
    tpu.vector_store %arg7[%c0_17, %c0_18], %19 {strides = array<i32>} : memref<64x128xf32, #tpu.memory_space<vmem>>, vector<64x128xf32>,
    return
  }
}

module attributes {stable_mosaic.version = 11 : i64} {
  func.func @_linear_kernel(%arg0: memref<16x64xf32, #tpu.memory_space<vmem>>, %arg1: memref<64x128xf32, #tpu.memory_space<vmem>>, %arg2: memref<1x128xf32, #tpu.memory_space<vmem>>, %arg3: memref<16x128xf32, #tpu.memory_space<vmem>>) attributes {dimension_semantics = [], scalar_prefetch = 0 : i64, scratch_operands = 0 : i64, tpu.core_type = #tpu.core_type<tc>} {
    %c0 = arith.constant 0 : index
    %c0_0 = arith.constant 0 : index
    %0 = vector.load %arg0[%c0, %c0_0] : memref<16x64xf32, #tpu.memory_space<vmem>>, vector<16x64xf32>
    %c0_1 = arith.constant 0 : index
    %c0_2 = arith.constant 0 : index
    %1 = vector.load %arg1[%c0_1, %c0_2] : memref<64x128xf32, #tpu.memory_space<vmem>>, vector<64x128xf32>
    %cst = arith.constant dense<0.000000e+00> : vector<16x128xf32>
    %2 = tpu.matmul %0, %1, %cst {dimension_numbers = #tpu.dot_dimension_numbers<[1], [0], [0], [1], [0, 0, 1, 1], [], []>} : vector<16x64xf32>, vector<64x128xf32>, vector<16x128xf32> -> vector<16x128xf32>
    %c0_3 = arith.constant 0 : index
    %c0_4 = arith.constant 0 : index
    %3 = vector.load %arg2[%c0_3, %c0_4] : memref<1x128xf32, #tpu.memory_space<vmem>>, vector<1x128xf32>
    %4 = vector.broadcast %3 : vector<1x128xf32> to vector<16x128xf32>
    %5 = arith.addf %2, %4 : vector<16x128xf32>
    %c0_5 = arith.constant 0 : index
    %c0_6 = arith.constant 0 : index
    %6 = vector.load %arg3[%c0_5, %c0_6] : memref<16x128xf32, #tpu.memory_space<vmem>>, vector<16x128xf32>
    tpu.vector_store %arg3[%c0_5, %c0_6], %5 {strides = array<i32>} : memref<16x128xf32, #tpu.memory_space<vmem>>, vector<16x128xf32>,
    return
  }
}

</mosaic_0001>

<llo_original>
// kernel: squeeze.3
$region0: #{squeeze.3}
  %s0 = inlined_call_operand.vmem [shape: f32[64], index: 0, kind: input, shape index: {}]
  %s1 = inlined_call_operand.hbm [shape: f32[2,2,16], index: 1, kind: output, shape index: {}]
  $region1: #{squeeze.3} parent=0
    #allocation0 [shape = 'u8[2048]{0}', space=vmem, size = 0x800, scoped, tag = 'operand span for operand 1']
    #allocation1 [shape = 's32[1]{0}', space=sflag, size = 0x4, scoped, tag = 'scoped memory for squeeze.3']
    #allocation2 [shape = 'u8[8192]{0}', space=vmem, size = 0x2000, scoped, tag = 'scoped mem for output reshape']
    #allocation3 [shape = 'u8[4096]{0}', space=vmem, size = 0x1000, scoped, tag = 'scoped mem for input reshape']
    %2 = vsyncpa [#allocation1], 0
    %s4 = ssub.s32 2, 1
    %v5 = vld [vmem:[%s0] sm:%s4]
    %6 = vst [vmem:[#allocation3] sm:%s4] %v5
    %v7 = vld [vmem:[#allocation3] sm:$0x1]
    %vm8 = vcmask 130048
    %9 = vst.msk [vmem:[#allocation2] sm:$0x1] %vm8, %v7
    %v10 = vld [vmem:[#allocation3] sm:$0x1]
    %11 = vrot.lane.b32.xlu0 %v10, 112
    %v12 = vpop.permute.xlu0 %11
    %vm13 = vcmask 130048
    %s14 = scalar_lea.vmem [#allocation2], 1
    %15 = vst.msk [vmem:[%s14] sm:$0x1] %vm13, %v12
    %v16 = vld [vmem:[#allocation3] sm:$0x1]
    %17 = vrot.lane.b32.xlu0 %v16, 96
    %v18 = vpop.permute.xlu0 %17
    %vm19 = vcmask 130048
    %s20 = scalar_lea.vmem [#allocation2], 8
    %21 = vst.msk [vmem:[%s20] sm:$0x1] %vm19, %v18
    %v22 = vld [vmem:[#allocation3] sm:$0x1]
    %23 = vrot.lane.b32.xlu0 %v22, 80
    %v24 = vpop.permute.xlu0 %23
    %vm25 = vcmask 130048
    %s26 = scalar_lea.vmem [#allocation2], 9
    %27 = vst.msk [vmem:[%s26] sm:$0x1] %vm25, %v24
    %s29 = ssub.s32 4, 1
    %v30 = vld [vmem:[#allocation2] sm:%s29]
    %s32 = ssub.s32 4, 1
    %33 = vst [vmem:[#allocation0] sm:%s32] %v30
    %s34 = scalar_lea.vmem [#allocation2], 8
    %v35 = vld [vmem:[%s34] sm:%s29]
    %s37 = ssub.s32 4, 1
    %s38 = scalar_lea.vmem [#allocation0], 2
    %39 = vst [vmem:[%s38] sm:%s37] %v35
    %41 = vsyncadd [#allocation1], 0
    %s43 = sshll.u32 [#allocation0], 4
    %s44 = int_to_ptr.vmem [resolvable:$true] %s43
    %s45 = sshll.u32 %s1, 4
    %s46 = int_to_ptr.hbm [resolvable:$true] %s45
    %48 = dma.vmem_to_hbm [thread:$0]  %s44, 64, %s46, [#allocation1]
    %50 = dma.done [#allocation1], 64
    %51 = vsyncpa [#allocation1], 1

// kernel: model_forward.2
$region0: #{model_forward.2}
  #allocation0 [shape = 'u32[]', space=smem, size = 0x4, offset = 0x4, fixed_abs, tag = 'smem constant byte address 0x4 - core index']
  #allocation1 [shape = 'u32[72,128]{1,0:T(1,128)}', space=vmem, size = 0x9000, scoped, tag = 'internal scratch']
  %s0 = inlined_call_operand.vmem [shape: f32[16,64], index: 0, kind: input, shape index: {}]
  %s1 = inlined_call_operand.hbm [shape: f32[64,128], index: 1, kind: input, shape index: {}]
  %s2 = inlined_call_operand.vmem [shape: f32[1,128], index: 2, kind: input, shape index: {}]
  %s3 = inlined_call_operand.vmem [shape: f32[16,128], index: 3, kind: output, shape index: {}]
  %s4 = sld [smem:[#allocation0]]
  $region26: #{model_forward.2} parent=0
    _
  %s6 = ssub.s32 1, %s4
  %s7 = scalar_select 0, %s6, %s4
  $region1: #{model_forward.2} parent=0
    #allocation2 [shape = 'u8[32768]{0}', space=vmem, size = 0x8000, scoped, tag = 'input window, operand 1, single buffered']
    #allocation3 [shape = 's32[1]{0}', space=sflag, size = 0x4, scoped, tag = 'scoped memory for model_forward.2']
    %8 = vsyncpa [#allocation3], 0
    // Predicated region
    $region2: #{model_forward.2} parent=1 // pred_check
      _
    $region3: #{model_forward.2} parent=1 // pred_check_branch
      %10 = sbr.rel (0) target = $region5
    $region4: #{model_forward.2} parent=1 // pred_region
      _
    $region5: #{model_forward.2} parent=1 // pred_fallthru
      _
    // Predicated region
    $region6: #{model_forward.2} parent=1 // pred_check
      _
    $region7: #{model_forward.2} parent=1 // pred_check_branch
      %12 = sbr.rel (0) target = $region9
    $region8: #{model_forward.2} parent=1 // pred_region
      %14 = vsyncadd [#allocation3], 0
      %s15 = sshll.u32 %s1, 4
      %s16 = int_to_ptr.hbm [resolvable:$true] %s15
      %s17 = sshll.u32 [#allocation2], 4
      %s18 = int_to_ptr.vmem [resolvable:$true] %s17
      %23 = dma.hbm_to_vmem [thread:$0]  %s16, 1024, %s18, [#allocation3], 128, 128, 8
    $region9: #{model_forward.2} parent=1 // pred_fallthru
      _
    // Predicated region
    $region10: #{model_forward.2} parent=1 // pred_check
      _
    $region11: #{model_forward.2} parent=1 // pred_check_branch
      %25 = sbr.rel (0) target = $region13
    $region12: #{model_forward.2} parent=1 // pred_region
      _
    $region13: #{model_forward.2} parent=1 // pred_fallthru
      _
    // Predicated region
    $region14: #{model_forward.2} parent=1 // pred_check
      _
    $region15: #{model_forward.2} parent=1 // pred_check_branch
      %27 = sbr.rel (0) target = $region17
    $region16: #{model_forward.2} parent=1 // pred_region
      %29 = dma.done [#allocation3], 1024
    $region17: #{model_forward.2} parent=1 // pred_fallthru
      _
    %v30 = vld [vmem:[%s0] sm:$0xff]
    %v31 = vld [vmem:[%s0 + $0x8] sm:$0xff]
    %v32 = vld [vmem:[#allocation2] sm:$0xff]
    %v33 = vld [vmem:[#allocation2 + $0x8] sm:$0xff]
    %v34 = vld [vmem:[#allocation2 + $0x10] sm:$0xff]
    %v35 = vld [vmem:[#allocation2 + $0x18] sm:$0xff]
    %v36 = vld [vmem:[#allocation2 + $0x20] sm:$0xff]
    %v37 = vld [vmem:[#allocation2 + $0x28] sm:$0xff]
    %v38 = vld [vmem:[#allocation2 + $0x30] sm:$0xff]
    %v39 = vld [vmem:[#allocation2 + $0x38] sm:$0xff]
    %v40 = vld [vmem:[%s2] sm:$0x1]
    %v42 = vperm.slane %v40, 0
    %vm44 = vcmask 523264
    %v46 = vsel %vm44, %v30, 0
    %v49 = vsel %vm44, %v31, 0
    %51 = vmatpush.msra.mxu0 0.0
    %52 = vmatpush.msra.mxu0 0.0
    %53 = vmatpush.msra.mxu0 0.0
    %54 = vmatpush.msra.mxu0 0.0
    %55 = vmatpush.msra.mxu0 0.0
    %56 = vmatpush.msra.mxu0 0.0
    %57 = vmatpush.msra.mxu0 0.0
    %58 = vmatpush.msra.mxu0 0.0
    %59 = vmatpush.msra.mxu0 %v39
    %60 = vmatpush.msra.mxu0 %v38
    %61 = vmatpush.msra.mxu0 %v37
    %62 = vmatpush.msra.mxu0 %v36
    %63 = vmatpush.msra.mxu0 %v35
    %64 = vmatpush.msra.mxu0 %v34
    %65 = vmatpush.msra.mxu0 %v33
    %66 = vmatpush.msra.mxu0 %v32
    %67 = vmatmul.f32.gmra.mxu0 %v46
    %v68 = vpop.f32.mrf.mxu0
    %v69 = vadd.f32 %v42, %v68
    %70 = vmatmul.f32.gmra.mxu0 %v49
    %v71 = vpop.f32.mrf.mxu0
    %v72 = vadd.f32 %v42, %v71
    %73 = vdwg.mxu0
    %74 = vst [vmem:[%s3] sm:$0xff] %v69
    %75 = vst [vmem:[%s3 + $0x8] sm:$0xff] %v72
    // Predicated region
    $region18: #{model_forward.2} parent=1 // pred_check
      _
    $region19: #{model_forward.2} parent=1 // pred_check_branch
      %77 = sbr.rel (0) target = $region21
    $region20: #{model_forward.2} parent=1 // pred_region
      _
    $region21: #{model_forward.2} parent=1 // pred_fallthru
      _
    // Predicated region
    $region22: #{model_forward.2} parent=1 // pred_check
      _
    $region23: #{model_forward.2} parent=1 // pred_check_branch
      %79 = sbr.rel (0) target = $region25
    $region24: #{model_forward.2} parent=1 // pred_region
      _
    $region25: #{model_forward.2} parent=1 // pred_fallthru
      _
    %80 = vsyncpa [#allocation3], 1

// kernel: model_forward.3
$region0: #{model_forward.3}
  #allocation0 [shape = 'u32[]', space=smem, size = 0x4, offset = 0x4, fixed_abs, tag = 'smem constant byte address 0x4 - core index']
  #allocation1 [shape = 'u32[72,128]{1,0:T(1,128)}', space=vmem, size = 0x9000, scoped, tag = 'internal scratch']
  %s0 = inlined_call_operand.vmem [shape: f32[64,32], index: 0, kind: input, shape index: {}]
  %s1 = inlined_call_operand.vmem [shape: f32[32,128], index: 1, kind: input, shape index: {}]
  %s2 = inlined_call_operand.vmem [shape: f32[1,128], index: 2, kind: input, shape index: {}]
  %s3 = inlined_call_operand.vmem [shape: f32[128,128], index: 3, kind: input, shape index: {}]
  %s4 = inlined_call_operand.vmem [shape: f32[1,128], index: 4, kind: input, shape index: {}]
  %s5 = inlined_call_operand.vmem [shape: f32[128,128], index: 5, kind: input, shape index: {}]
  %s6 = inlined_call_operand.vmem [shape: f32[1,128], index: 6, kind: input, shape index: {}]
  %s7 = inlined_call_operand.vmem [shape: f32[64,128], index: 7, kind: output, shape index: {}]
  %s8 = sld [smem:[#allocation0]]
  $region38: #{model_forward.3} parent=0
    _
  %s10 = ssub.s32 1, %s8
  %s11 = scalar_select 0, %s10, %s8
  // Predicated region
  $region2: #{model_forward.3} parent=0 // pred_check
    _
  $region3: #{model_forward.3} parent=0 // pred_check_branch
    %13 = sbr.rel (0) target = $region5
  $region4: #{model_forward.3} parent=0 // pred_region
    _
  $region5: #{model_forward.3} parent=0 // pred_fallthru
    _
  // Predicated region
  $region6: #{model_forward.3} parent=0 // pred_check
    _
  $region7: #{model_forward.3} parent=0 // pred_check_branch
    %15 = sbr.rel (0) target = $region9
  $region8: #{model_forward.3} parent=0 // pred_region
    _
  $region9: #{model_forward.3} parent=0 // pred_fallthru
    _
  // Predicated region
  $region10: #{model_forward.3} parent=0 // pred_check
    _
  $region11: #{model_forward.3} parent=0 // pred_check_branch
    %17 = sbr.rel (0) target = $region13
  $region12: #{model_forward.3} parent=0 // pred_region
    _
  $region13: #{model_forward.3} parent=0 // pred_fallthru
    _
  // Predicated region
  $region14: #{model_forward.3} parent=0 // pred_check
    _
  $region15: #{model_forward.3} parent=0 // pred_check_branch
    %19 = sbr.rel (0) target = $region17
  $region16: #{model_forward.3} parent=0 // pred_region
    _
  $region17: #{model_forward.3} parent=0 // pred_fallthru
    _
  // Predicated region
  $region18: #{model_forward.3} parent=0 // pred_check
    _
  $region19: #{model_forward.3} parent=0 // pred_check_branch
    %21 = sbr.rel (0) target = $region21
  $region20: #{model_forward.3} parent=0 // pred_region
    _
  $region21: #{model_forward.3} parent=0 // pred_fallthru
    _
  // Predicated region
  $region22: #{model_forward.3} parent=0 // pred_check
    _
  $region23: #{model_forward.3} parent=0 // pred_check_branch
    %23 = sbr.rel (0) target = $region25
  $region24: #{model_forward.3} parent=0 // pred_region
    _
  $region25: #{model_forward.3} parent=0 // pred_fallthru
    _
  // Predicated region
  $region26: #{model_forward.3} parent=0 // pred_check
    _
  $region27: #{model_forward.3} parent=0 // pred_check_branch
    %25 = sbr.rel (0) target = $region29
  $region28: #{model_forward.3} parent=0 // pred_region
    _
  $region29: #{model_forward.3} parent=0 // pred_fallthru
    _
  %v26 = vld [vmem:[%s0] sm:$0xff]
  %v27 = vld [vmem:[%s0 + $0x8] sm:$0xff]
  %v28 = vld [vmem:[%s0 + $0x10] sm:$0xff]
  %v29 = vld [vmem:[%s0 + $0x18] sm:$0xff]
  %v30 = vld [vmem:[%s0 + $0x20] sm:$0xff]
  %v31 = vld [vmem:[%s0 + $0x28] sm:$0xff]
  %v32 = vld [vmem:[%s0 + $0x30] sm:$0xff]
  %v33 = vld [vmem:[%s0 + $0x38] sm:$0xff]
  %v34 = vld [vmem:[%s1] sm:$0xff]
  %v35 = vld [vmem:[%s1 + $0x8] sm:$0xff]
  %v36 = vld [vmem:[%s1 + $0x10] sm:$0xff]
  %v37 = vld [vmem:[%s1 + $0x18] sm:$0xff]
  %v38 = vld [vmem:[%s2] sm:$0x1]
  %v40 = vperm.slane %v38, 0
  %vm42 = vcmask 261120
  %v44 = vsel %vm42, %v26, 0
  %v47 = vsel %vm42, %v27, 0
  %v50 = vsel %vm42, %v28, 0
  %v53 = vsel %vm42, %v29, 0
  %v56 = vsel %vm42, %v30, 0
  %v59 = vsel %vm42, %v31, 0
  %v62 = vsel %vm42, %v32, 0
  %v65 = vsel %vm42, %v33, 0
  %67 = vmatpush.msra.mxu0 0.0
  %68 = vmatpush.msra.mxu0 0.0
  %69 = vmatpush.msra.mxu0 0.0
  %70 = vmatpush.msra.mxu0 0.0
  %71 = vmatpush.msra.mxu0 0.0
  %72 = vmatpush.msra.mxu0 0.0
  %73 = vmatpush.msra.mxu0 0.0
  %74 = vmatpush.msra.mxu0 0.0
  %75 = vmatpush.msra.mxu0 0.0
  %76 = vmatpush.msra.mxu0 0.0
  %77 = vmatpush.msra.mxu0 0.0
  %78 = vmatpush.msra.mxu0 0.0
  %79 = vmatpush.msra.mxu0 %v37
  %80 = vmatpush.msra.mxu0 %v36
  %81 = vmatpush.msra.mxu0 %v35
  %82 = vmatpush.msra.mxu0 %v34
  %83 = vmatmul.f32.gmra.mxu0 %v44
  %v84 = vpop.f32.mrf.mxu0
  %v85 = vadd.f32 %v40, %v84
  %86 = vmatmul.f32.gmra.mxu0 %v47
  %v87 = vpop.f32.mrf.mxu0
  %v88 = vadd.f32 %v40, %v87
  %89 = vmatmul.f32.gmra.mxu0 %v50
  %v90 = vpop.f32.mrf.mxu0
  %v91 = vadd.f32 %v40, %v90
  %92 = vmatmul.f32.gmra.mxu0 %v53
  %v93 = vpop.f32.mrf.mxu0
  %v94 = vadd.f32 %v40, %v93
  %95 = vmatmul.f32.gmra.mxu0 %v56
  %v96 = vpop.f32.mrf.mxu0
  %v97 = vadd.f32 %v40, %v96
  %98 = vmatmul.f32.gmra.mxu0 %v59
  %v99 = vpop.f32.mrf.mxu0
  %v100 = vadd.f32 %v40, %v99
  %101 = vmatmul.f32.gmra.mxu0 %v62
  %v102 = vpop.f32.mrf.mxu0
  %v103 = vadd.f32 %v40, %v102
  %104 = vmatmul.f32.gmra.mxu0 %v65
  %v105 = vpop.f32.mrf.mxu0
  %v106 = vadd.f32 %v40, %v105
  %107 = vdwg.mxu0
  %v108 = vmax.f32 %v85, 0.0
  %v109 = vmax.f32 %v88, 0.0
  %v110 = vmax.f32 %v91, 0.0
  %v111 = vmax.f32 %v94, 0.0
  %v112 = vmax.f32 %v97, 0.0
  %v113 = vmax.f32 %v100, 0.0
  %v114 = vmax.f32 %v103, 0.0
  %v115 = vmax.f32 %v106, 0.0
  %v116 = vld [vmem:[%s3] sm:$0xff]
  %v117 = vld [vmem:[%s3 + $0x8] sm:$0xff]
  %v118 = vld [vmem:[%s3 + $0x10] sm:$0xff]
  %v119 = vld [vmem:[%s3 + $0x18] sm:$0xff]
  %v120 = vld [vmem:[%s3 + $0x20] sm:$0xff]
  %v121 = vld [vmem:[%s3 + $0x28] sm:$0xff]
  %v122 = vld [vmem:[%s3 + $0x30] sm:$0xff]
  %v123 = vld [vmem:[%s3 + $0x38] sm:$0xff]
  %v124 = vld [vmem:[%s3 + $0x40] sm:$0xff]
  %v125 = vld [vmem:[%s3 + $0x48] sm:$0xff]
  %v126 = vld [vmem:[%s3 + $0x50] sm:$0xff]
  %v127 = vld [vmem:[%s3 + $0x58] sm:$0xff]
  %v128 = vld [vmem:[%s3 + $0x60] sm:$0xff]
  %v129 = vld [vmem:[%s3 + $0x68] sm:$0xff]
  %v130 = vld [vmem:[%s3 + $0x70] sm:$0xff]
  %v131 = vld [vmem:[%s3 + $0x78] sm:$0xff]
  %v132 = vld [vmem:[%s4] sm:$0x1]
  %v134 = vperm.slane %v132, 0
  %136 = vmatpush.msra.mxu0 %v131
  %137 = vmatpush.msra.mxu0 %v130
  %138 = vmatpush.msra.mxu0 %v129
  %139 = vmatpush.msra.mxu0 %v128
  %140 = vmatpush.msra.mxu0 %v127
  %141 = vmatpush.msra.mxu0 %v126
  %142 = vmatpush.msra.mxu0 %v125
  %143 = vmatpush.msra.mxu0 %v124
  %144 = vmatpush.msra.mxu0 %v123
  %145 = vmatpush.msra.mxu0 %v122
  %146 = vmatpush.msra.mxu0 %v121
  %147 = vmatpush.msra.mxu0 %v120
  %148 = vmatpush.msra.mxu0 %v119
  %149 = vmatpush.msra.mxu0 %v118
  %150 = vmatpush.msra.mxu0 %v117
  %151 = vmatpush.msra.mxu0 %v116
  %152 = vmatmul.f32.gmra.mxu0 %v108
  %v153 = vpop.f32.mrf.mxu0
  %v154 = vadd.f32 %v134, %v153
  %155 = vmatmul.f32.gmra.mxu0 %v109
  %v156 = vpop.f32.mrf.mxu0
  %v157 = vadd.f32 %v134, %v156
  %158 = vmatmul.f32.gmra.mxu0 %v110
  %v159 = vpop.f32.mrf.mxu0
  %v160 = vadd.f32 %v134, %v159
  %161 = vmatmul.f32.gmra.mxu0 %v111
  %v162 = vpop.f32.mrf.mxu0
  %v163 = vadd.f32 %v134, %v162
  %164 = vmatmul.f32.gmra.mxu0 %v112
  %v165 = vpop.f32.mrf.mxu0
  %v166 = vadd.f32 %v134, %v165
  %167 = vmatmul.f32.gmra.mxu0 %v113
  %v168 = vpop.f32.mrf.mxu0
  %v169 = vadd.f32 %v134, %v168
  %170 = vmatmul.f32.gmra.mxu0 %v114
  %v171 = vpop.f32.mrf.mxu0
  %v172 = vadd.f32 %v134, %v171
  %173 = vmatmul.f32.gmra.mxu0 %v115
  %v174 = vpop.f32.mrf.mxu0
  %v175 = vadd.f32 %v134, %v174
  %176 = vdwg.mxu0
  %v177 = vmax.f32 %v154, 0.0
  %v178 = vmax.f32 %v157, 0.0
  %v179 = vmax.f32 %v160, 0.0
  %v180 = vmax.f32 %v163, 0.0
  %v181 = vmax.f32 %v166, 0.0
  %v182 = vmax.f32 %v169, 0.0
  %v183 = vmax.f32 %v172, 0.0
  %v184 = vmax.f32 %v175, 0.0
  %v185 = vld [vmem:[%s5] sm:$0xff]
  %v186 = vld [vmem:[%s5 + $0x8] sm:$0xff]
  %v187 = vld [vmem:[%s5 + $0x10] sm:$0xff]
  %v188 = vld [vmem:[%s5 + $0x18] sm:$0xff]
  %v189 = vld [vmem:[%s5 + $0x20] sm:$0xff]
  %v190 = vld [vmem:[%s5 + $0x28] sm:$0xff]
  %v191 = vld [vmem:[%s5 + $0x30] sm:$0xff]
  %v192 = vld [vmem:[%s5 + $0x38] sm:$0xff]
  %v193 = vld [vmem:[%s5 + $0x40] sm:$0xff]
  %v194 = vld [vmem:[%s5 + $0x48] sm:$0xff]
  %v195 = vld [vmem:[%s5 + $0x50] sm:$0xff]
  %v196 = vld [vmem:[%s5 + $0x58] sm:$0xff]
  %v197 = vld [vmem:[%s5 + $0x60] sm:$0xff]
  %v198 = vld [vmem:[%s5 + $0x68] sm:$0xff]
  %v199 = vld [vmem:[%s5 + $0x70] sm:$0xff]
  %v200 = vld [vmem:[%s5 + $0x78] sm:$0xff]
  %v201 = vld [vmem:[%s6] sm:$0x1]
  %v203 = vperm.slane %v201, 0
  %205 = vmatpush.msra.mxu0 %v200
  %206 = vmatpush.msra.mxu0 %v199
  %207 = vmatpush.msra.mxu0 %v198
  %208 = vmatpush.msra.mxu0 %v197
  %209 = vmatpush.msra.mxu0 %v196
  %210 = vmatpush.msra.mxu0 %v195
  %211 = vmatpush.msra.mxu0 %v194
  %212 = vmatpush.msra.mxu0 %v193
  %213 = vmatpush.msra.mxu0 %v192
  %214 = vmatpush.msra.mxu0 %v191
  %215 = vmatpush.msra.mxu0 %v190
  %216 = vmatpush.msra.mxu0 %v189
  %217 = vmatpush.msra.mxu0 %v188
  %218 = vmatpush.msra.mxu0 %v187
  %219 = vmatpush.msra.mxu0 %v186
  %220 = vmatpush.msra.mxu0 %v185
  %221 = vmatmul.f32.gmra.mxu0 %v177
  %v222 = vpop.f32.mrf.mxu0
  %v223 = vadd.f32 %v203, %v222
  %224 = vmatmul.f32.gmra.mxu0 %v178
  %v225 = vpop.f32.mrf.mxu0
  %v226 = vadd.f32 %v203, %v225
  %227 = vmatmul.f32.gmra.mxu0 %v179
  %v228 = vpop.f32.mrf.mxu0
  %v229 = vadd.f32 %v203, %v228
  %230 = vmatmul.f32.gmra.mxu0 %v180
  %v231 = vpop.f32.mrf.mxu0
  %v232 = vadd.f32 %v203, %v231
  %233 = vmatmul.f32.gmra.mxu0 %v181
  %v234 = vpop.f32.mrf.mxu0
  %v235 = vadd.f32 %v203, %v234
  %236 = vmatmul.f32.gmra.mxu0 %v182
  %v237 = vpop.f32.mrf.mxu0
  %v238 = vadd.f32 %v203, %v237
  %239 = vmatmul.f32.gmra.mxu0 %v183
  %v240 = vpop.f32.mrf.mxu0
  %v241 = vadd.f32 %v203, %v240
  %242 = vmatmul.f32.gmra.mxu0 %v184
  %v243 = vpop.f32.mrf.mxu0
  %v244 = vadd.f32 %v203, %v243
  %245 = vdwg.mxu0
  %246 = vst [vmem:[%s7] sm:$0xff] %v223
  %247 = vst [vmem:[%s7 + $0x8] sm:$0xff] %v226
  %248 = vst [vmem:[%s7 + $0x10] sm:$0xff] %v229
  %249 = vst [vmem:[%s7 + $0x18] sm:$0xff] %v232
  %250 = vst [vmem:[%s7 + $0x20] sm:$0xff] %v235
  %251 = vst [vmem:[%s7 + $0x28] sm:$0xff] %v238
  %252 = vst [vmem:[%s7 + $0x30] sm:$0xff] %v241
  %253 = vst [vmem:[%s7 + $0x38] sm:$0xff] %v244
  // Predicated region
  $region30: #{model_forward.3} parent=0 // pred_check
    _
  $region31: #{model_forward.3} parent=0 // pred_check_branch
    %255 = sbr.rel (0) target = $region33
  $region32: #{model_forward.3} parent=0 // pred_region
    _
  $region33: #{model_forward.3} parent=0 // pred_fallthru
    _
  // Predicated region
  $region34: #{model_forward.3} parent=0 // pred_check
    _
  $region35: #{model_forward.3} parent=0 // pred_check_branch
    %257 = sbr.rel (0) target = $region37
  $region36: #{model_forward.3} parent=0 // pred_region
    _
  $region37: #{model_forward.3} parent=0 // pred_fallthru
    _

</llo_original>
